<compile_context>
chip_gen: v5e
topology: v5e:2x2
jax: 0.10.0
libtpu: 0.0.40
codegen_flags: <defaults>
</compile_context>

<pallas_src>
import math
import functools

import numpy as np
import jax
import jax.numpy as jnp
from jax import lax
from jax.experimental import pallas as pl
from jax.experimental.pallas import tpu as pltpu


# ----------------------------- parameter setup (glue, plain JAX) -----------------------------

def calculate_mask_index(kernel_length_now, largest_kernel_length):
    right = math.ceil((largest_kernel_length - 1) / 2) - math.ceil((kernel_length_now - 1) / 2)
    left = largest_kernel_length - kernel_length_now - right
    return left, left + kernel_length_now


def build_params(layer_parameter_list, key):
    """Deterministically build (mask, weight, bias) matching creak_layer_mask shapes."""
    largest = layer_parameter_list[-1][-1]
    masks, weights, biases = [], [], []
    for (cin, cout, k) in layer_parameter_list:
        key, wk, bk = jax.random.split(key, 3)
        fan_in = cin * k
        bound = 1.0 / math.sqrt(fan_in)          # mimics PyTorch Conv1d default init range
        w = jax.random.uniform(wk, (cout, cin, k), jnp.float32, -bound, bound)
        b = jax.random.uniform(bk, (cout,), jnp.float32, -bound, bound)
        ind_l, ind_r = calculate_mask_index(k, largest)
        big_w = jnp.zeros((cout, cin, largest), jnp.float32).at[:, :, ind_l:ind_r].set(w)
        m = np.ones((cout, cin, largest), np.float32)
        m[:, :, :ind_l] = 0.0
        m[:, :, ind_r:] = 0.0
        masks.append(jnp.asarray(m))
        weights.append(big_w)
        biases.append(b)
    return (jnp.concatenate(masks, axis=0),
            jnp.concatenate(weights, axis=0),
            jnp.concatenate(biases, axis=0))


def _round_up(x, m):
    return ((x + m - 1) // m) * m


# ----------------------------- Pallas kernels -----------------------------

def _gram_kernel(xc_ref, g_ref, s_ref):
    """Pass 1 (reduction over column tiles): G += X X^T, s += X @ 1.
    Padded columns of xcol are exactly zero, so they contribute nothing."""
    @pl.when(pl.program_id(0) == 0)
    def _():
        g_ref[...] = jnp.zeros_like(g_ref)
        s_ref[...] = jnp.zeros_like(s_ref)

    xc = xc_ref[...]                                      # (CinK, tcol)
    g_ref[...] += lax.dot_general(                        # (CinK, CinK)  A @ A^T (NT matmul)
        xc, xc, (((1,), (1,)), ((), ())), preferred_element_type=jnp.float32)
    s_ref[...] += jnp.sum(xc, axis=1, keepdims=True)      # (CinK, 1)


def _conv_bn_relu_kernel(w_ref, b_ref, xc_ref, o_ref):
    """Pass 2: fused conv + BatchNorm + ReLU.  BN already folded into w'/b':
    y = relu(W' @ xcol_tile + b')."""
    y = jnp.dot(w_ref[...], xc_ref[...], preferred_element_type=jnp.float32) + b_ref[...]
    o_ref[...] = jnp.maximum(y, 0.0)                      # lane-dense unmasked store


# ----------------------------- wrapper -----------------------------

def os_cnn_layer(x, weight, mask, bias, *, eps=1e-5, max_col_tile=1024):
    N, Cin, L = x.shape
    Cout, _, K = weight.shape
    CinK = Cin * K

    # ConstantPad1d((int((K-1)/2), int(K/2)), 0) -> 'same' length output
    pad_l = (K - 1) // 2
    pad_r = K // 2
    xp = jnp.pad(x, ((0, 0), (0, 0), (pad_l, pad_r)))                  # (N, Cin, L+K-1)

    # im2col (wrapper-side layout plumbing): xcol[c*K + k, n*L + l] = xp[n, c, l + k]
    cols = jnp.stack([xp[:, :, k:k + L] for k in range(K)], axis=2)    # (N, Cin, K, L)
    xcol = cols.transpose(1, 2, 0, 3).reshape(CinK, N * L).astype(jnp.float32)

    # Fold batch*length into the lane axis; pad to a lane-dense tile multiple.
    NL = N * L
    tcol = min(max_col_tile, _round_up(NL, 128))
    NLp = _round_up(NL, tcol)
    if NLp != NL:
        xcol = jnp.pad(xcol, ((0, 0), (0, NLp - NL)))
    T = NLp // tcol

    # ---- pass 1: Gram matrix + row sums (tiny resident outputs, reduction grid) ----
    g, s = pl.pallas_call(
        _gram_kernel,
        grid=(T,),
        in_specs=[pl.BlockSpec((CinK, tcol), lambda t: (0, t))],
        out_specs=(
            pl.BlockSpec((CinK, CinK), lambda t: (0, 0)),
            pl.BlockSpec((CinK, 1), lambda t: (0, 0)),
        ),
        out_shape=(
            jax.ShapeDtypeStruct((CinK, CinK), jnp.float32),
            jax.ShapeDtypeStruct((CinK, 1), jnp.float32),
        ),
        compiler_params=pltpu.CompilerParams(
            dimension_semantics=("arbitrary",),
            vmem_limit_bytes=64 * 1024 * 1024,
        ),
    )(xcol)

    # ---- glue: BatchNorm (training mode, biased var, gamma=1, beta=0) folded into W, b ----
    wf = (weight * mask).reshape(Cout, CinK).astype(jnp.float32)   # pre-masked, flattened weight
    bf = bias.astype(jnp.float32)
    ws = (wf @ s)[:, 0]                                            # (Cout,)  sum_cols(W x)
    mean = (ws + NL * bf) / NL                                     # E[conv]
    quad = jnp.sum((wf @ g) * wf, axis=1)                          # diag(W G W^T) = sum_cols (Wx)^2
    sumsq = quad + 2.0 * bf * ws + NL * bf * bf                    # sum_cols (Wx + b)^2
    var = jnp.maximum(sumsq / NL - mean * mean, 0.0)               # biased batch variance
    scale = lax.rsqrt(var + eps)
    w2 = wf * scale[:, None]                                       # BN folded into conv weight
    b2 = (scale * (bf - mean)).reshape(Cout, 1)                    # BN folded into conv bias

    # ---- pass 2: fused conv + BN + ReLU, fully parallel over column tiles ----
    y = pl.pallas_call(
        _conv_bn_relu_kernel,
        grid=(T,),
        in_specs=[
            pl.BlockSpec((Cout, CinK), lambda t: (0, 0)),      # folded weight (resident)
            pl.BlockSpec((Cout, 1), lambda t: (0, 0)),         # folded bias (resident)
            pl.BlockSpec((CinK, tcol), lambda t: (0, t)),      # im2col column tile
        ],
        out_specs=pl.BlockSpec((Cout, tcol), lambda t: (0, t)),
        out_shape=jax.ShapeDtypeStruct((Cout, NLp), jnp.float32),
        compiler_params=pltpu.CompilerParams(
            dimension_semantics=("parallel",),
            vmem_limit_bytes=64 * 1024 * 1024,
        ),
    )(w2, b2, xcol)

    # Drop pad columns and restore NCL layout: columns are ordered n*L + l.
    return y[:, :NL].reshape(Cout, N, L).transpose(1, 0, 2)


# ----------------------------- pure-JAX reference -----------------------------

def reference(x, weight, mask, bias, eps=1e-5):
    w = weight * mask
    K = w.shape[-1]
    xp = jnp.pad(x, ((0, 0), (0, 0), ((K - 1) // 2, K // 2)))
    conv = jax.lax.conv_general_dilated(
        xp, w, window_strides=(1,), padding="VALID",
        dimension_numbers=("NCH", "OIH", "NCH"))
    conv = conv + bias[None, :, None]
    mean = conv.mean(axis=(0, 2), keepdims=True)
    var = ((conv - mean) ** 2).mean(axis=(0, 2), keepdims=True)
    y = (conv - mean) * jax.lax.rsqrt(var + eps)
    return jnp.maximum(y, 0.0)


# ----------------------------- main -----------------------------

if __name__ == "__main__":
    # layer_parameters: list of (in_channels, out_channels, kernel_size) as in OS_CNN_2
    layer_parameters = [(4, 8, 3), (4, 8, 5), (4, 8, 7)]   # -> Cin=4, Cout=24, K=7

    key = jax.random.PRNGKey(0)
    key, xk = jax.random.split(key)
    mask, weight, bias = build_params(layer_parameters, key)

    N, Cin, L = 2, 4, 16
    x = jax.random.normal(xk, (N, Cin, L), jnp.float32)

    out = os_cnn_layer(x, weight, mask, bias)
    out = jax.block_until_ready(out)

    ref = reference(x, weight, mask, bias)
    assert out.shape == ref.shape == (N, mask.shape[0], L)
    assert jnp.allclose(out, ref, atol=1e-4, rtol=1e-4), "Pallas result mismatch vs reference"

    # TODO(synk): BatchNorm running_mean/running_var bookkeeping (training-side state update)
    # is not part of the returned tensor and is not implemented.
    print("KERNEL_OK")
</pallas_src>

<mosaic_0001>
module attributes {stable_mosaic.version = 11 : i64} {
  func.func @_gram_kernel(%arg0: i32, %arg1: memref<28x128xf32, #tpu.memory_space<vmem>>, %arg2: memref<28x28xf32, #tpu.memory_space<vmem>>, %arg3: memref<28x1xf32, #tpu.memory_space<vmem>>) attributes {dimension_semantics = [#tpu.dimension_semantics<arbitrary>], iteration_bounds = array<i64: 1>, scalar_prefetch = 0 : i64, scratch_operands = 0 : i64, tpu.core_type = #tpu.core_type<tc>, window_params = [{transform_indices = @transform_0, window_bounds = array<i64: 28, 128>}, {pipeline_mode = #tpu.pipeline_mode<synchronous>, transform_indices = @transform_1, window_bounds = array<i64: 28, 28>}, {pipeline_mode = #tpu.pipeline_mode<synchronous>, transform_indices = @transform_2, window_bounds = array<i64: 28, 1>}]} {
    %c0_i32 = arith.constant 0 : i32
    %0 = arith.cmpi eq, %arg0, %c0_i32 : i32
    %1 = arith.extui %0 : i1 to i32
    %c0_i32_0 = arith.constant 0 : i32
    %2 = arith.cmpi ne, %1, %c0_i32_0 : i32
    scf.if %2 {
      %cst_11 = arith.constant 0.000000e+00 : f32
      %13 = vector.broadcast %cst_11 : f32 to vector<28x28xf32>
      %c0_12 = arith.constant 0 : index
      %c0_13 = arith.constant 0 : index
      %14 = vector.load %arg2[%c0_12, %c0_13] : memref<28x28xf32, #tpu.memory_space<vmem>>, vector<28x28xf32>
      tpu.vector_store %arg2[%c0_12, %c0_13], %13 {strides = array<i32>} : memref<28x28xf32, #tpu.memory_space<vmem>>, vector<28x28xf32>,
      %cst_14 = arith.constant 0.000000e+00 : f32
      %15 = vector.broadcast %cst_14 : f32 to vector<28x1xf32>
      %c0_15 = arith.constant 0 : index
      %c0_16 = arith.constant 0 : index
      %16 = vector.load %arg3[%c0_15, %c0_16] : memref<28x1xf32, #tpu.memory_space<vmem>>, vector<28x1xf32>
      tpu.vector_store %arg3[%c0_15, %c0_16], %15 {strides = array<i32>} : memref<28x1xf32, #tpu.memory_space<vmem>>, vector<28x1xf32>,
    } else {
    }
    %c0 = arith.constant 0 : index
    %c0_1 = arith.constant 0 : index
    %3 = vector.load %arg1[%c0, %c0_1] : memref<28x128xf32, #tpu.memory_space<vmem>>, vector<28x128xf32>
    %c0_2 = arith.constant 0 : index
    %c0_3 = arith.constant 0 : index
    %4 = vector.load %arg2[%c0_2, %c0_3] : memref<28x28xf32, #tpu.memory_space<vmem>>, vector<28x28xf32>
    %cst = arith.constant dense<0.000000e+00> : vector<28x28xf32>
    %5 = tpu.matmul %3, %3, %cst {dimension_numbers = #tpu.dot_dimension_numbers<[1], [1], [0], [0], [0, 0, 1, 0], [], []>} : vector<28x128xf32>, vector<28x128xf32>, vector<28x28xf32> -> vector<28x28xf32>
    %6 = arith.addf %4, %5 : vector<28x28xf32>
    %c0_4 = arith.constant 0 : index
    %c0_5 = arith.constant 0 : index
    %7 = vector.load %arg2[%c0_4, %c0_5] : memref<28x28xf32, #tpu.memory_space<vmem>>, vector<28x28xf32>
    tpu.vector_store %arg2[%c0_4, %c0_5], %6 {strides = array<i32>} : memref<28x28xf32, #tpu.memory_space<vmem>>, vector<28x28xf32>,
    %c0_6 = arith.constant 0 : index
    %c0_7 = arith.constant 0 : index
    %8 = vector.load %arg3[%c0_6, %c0_7] : memref<28x1xf32, #tpu.memory_space<vmem>>, vector<28x1xf32>
    %cst_8 = arith.constant dense<0.000000e+00> : vector<28xf32>
    %9 = vector.multi_reduction <add>, %3, %cst_8 [1] : vector<28x128xf32> to vector<28xf32>
    %10 = vector.shape_cast %9 : vector<28xf32> to vector<28x1xf32>
    %11 = arith.addf %8, %10 : vector<28x1xf32>
    %c0_9 = arith.constant 0 : index
    %c0_10 = arith.constant 0 : index
    %12 = vector.load %arg3[%c0_9, %c0_10] : memref<28x1xf32, #tpu.memory_space<vmem>>, vector<28x1xf32>
    tpu.vector_store %arg3[%c0_9, %c0_10], %11 {strides = array<i32>} : memref<28x1xf32, #tpu.memory_space<vmem>>, vector<28x1xf32>,
    return
  }
  func.func @transform_0(%arg0: i32) -> (i32, i32) {
    %c0_i32 = arith.constant 0 : i32
    %c0_i32_0 = arith.constant 0 : i32
    return %c0_i32, %arg0 : i32, i32
  }
  func.func @transform_1(%arg0: i32) -> (i32, i32) {
    %c0_i32 = arith.constant 0 : i32
    %c0_i32_0 = arith.constant 0 : i32
    %c0_i32_1 = arith.constant 0 : i32
    return %c0_i32, %c0_i32_0 : i32, i32
  }
  func.func @transform_2(%arg0: i32) -> (i32, i32) {
    %c0_i32 = arith.constant 0 : i32
    %c0_i32_0 = arith.constant 0 : i32
    %c0_i32_1 = arith.constant 0 : i32
    return %c0_i32, %c0_i32_0 : i32, i32
  }
}

</mosaic_0001>

<llo_original>
// kernel: tpu_custom_call.1
$region0: #{tpu_custom_call.1}
  #allocation0 [shape = 'u32[]', space=smem, size = 0x4, offset = 0x4, fixed_abs, tag = 'smem constant byte address 0x4 - core index']
  #allocation1 [shape = 'u32[72,128]{1,0:T(1,128)}', space=vmem, size = 0x9000, scoped, tag = 'internal scratch']
  %s0 = inlined_call_operand.hbm [shape: f32[28,128], index: 0, kind: input, shape index: {}]
  %s1 = inlined_call_operand.hbm [shape: f32[28,28], index: 1, kind: output, shape index: {0}]
  %s2 = inlined_call_operand.vmem [shape: f32[28,1], index: 2, kind: output, shape index: {1}]
  %3 = xla_tuple %s1, %s2
  %s4 = sld [smem:[#allocation0]]
  $region30: #{tpu_custom_call.1} parent=0
    _
  %s6 = ssub.s32 1, %s4
  %s7 = scalar_select 0, %s6, %s4
  $region1: #{tpu_custom_call.1} parent=0
    #allocation2 [shape = 'u8[16384]{0}', space=vmem, size = 0x4000, scoped, tag = 'input window, operand 0, single buffered']
    #allocation3 [shape = 's32[1]{0}', space=sflag, size = 0x4, scoped, tag = 'scoped memory for tpu_custom_call.1']
    #allocation4 [shape = 's32[1]{0}', space=sflag, size = 0x4, scoped, tag = 'scoped memory for tpu_custom_call.1']
    #allocation5 [shape = 'u8[16384]{0}', space=vmem, size = 0x4000, scoped, tag = 'output window, operand 0, single buffered']
    %8 = vsyncpa [#allocation3], 0
    %9 = vsyncpa [#allocation4], 0
    // Predicated region
    $region2: #{tpu_custom_call.1} parent=1 // pred_check
      _
    $region3: #{tpu_custom_call.1} parent=1 // pred_check_branch
      %11 = sbr.rel (0) target = $region5
    $region4: #{tpu_custom_call.1} parent=1 // pred_region
      %13 = vsyncadd [#allocation3], 0
      %s14 = sshll.u32 %s0, 4
      %s15 = int_to_ptr.hbm [resolvable:$true] %s14
      %s16 = sshll.u32 [#allocation2], 4
      %s17 = int_to_ptr.vmem [resolvable:$true] %s16
      %22 = dma.hbm_to_vmem [thread:$0]  %s15, 512, %s17, [#allocation3], 128, 128, 8
    $region5: #{tpu_custom_call.1} parent=1 // pred_fallthru
      _
    // Predicated region
    $region6: #{tpu_custom_call.1} parent=1 // pred_check
      _
    $region7: #{tpu_custom_call.1} parent=1 // pred_check_branch
      %24 = sbr.rel (0) target = $region9
    $region8: #{tpu_custom_call.1} parent=1 // pred_region
      %26 = dma.done [#allocation3], 512
    $region9: #{tpu_custom_call.1} parent=1 // pred_fallthru
      _
    %p27 = scmp.eq.s32.totalorder 0, 0
    // Predicated region
    $region10: #{tpu_custom_call.1} parent=1 // pred_check
      %p28 = pneg %p27
    $region11: #{tpu_custom_call.1} parent=1 // pred_check_branch
      %30 = sbr.rel (%p28) target = $region13
    $region12: #{tpu_custom_call.1} parent=1 // pred_region
      %vm31 = vcmask 228352
      %32 = vst.msk [vmem:[#allocation5] sm:$0xff] %vm31, 0.0
      %33 = vst.msk [vmem:[#allocation5 + $0x8] sm:$0xff] %vm31, 0.0
      %34 = vst.msk [vmem:[#allocation5 + $0x10] sm:$0xff] %vm31, 0.0
      %vm35 = vcmask 224256
      %36 = vst.msk [vmem:[#allocation5 + $0x18] sm:$0xf] %vm35, 0.0
      %vm37 = vcmask 7168
      %38 = vst.msk [vmem:[%s2] sm:$0xff] %vm37, 0.0
      %39 = vst.msk [vmem:[%s2 + $0x8] sm:$0xff] %vm37, 0.0
      %40 = vst.msk [vmem:[%s2 + $0x10] sm:$0xff] %vm37, 0.0
      %vm41 = vcmask 3072
      %42 = vst.msk [vmem:[%s2 + $0x18] sm:$0xf] %vm41, 0.0
    $region13: #{tpu_custom_call.1} parent=1 // pred_fallthru
      _
    %v43 = vld [vmem:[#allocation2] sm:$0xff]
    %v44 = vld [vmem:[#allocation2 + $0x8] sm:$0xff]
    %v45 = vld [vmem:[#allocation2 + $0x10] sm:$0xff]
    %v46 = vld [vmem:[#allocation2 + $0x18] sm:$0xf]
    %v47 = vld [vmem:[#allocation5] sm:$0xff]
    %v48 = vld [vmem:[#allocation5 + $0x8] sm:$0xff]
    %v49 = vld [vmem:[#allocation5 + $0x10] sm:$0xff]
    %v50 = vld [vmem:[#allocation5 + $0x18] sm:$0xf]
    %51 = vmatpush.xpose.msra.mxu0 0.0
    %52 = vmatpush.xpose.msra.mxu0 0.0
    %53 = vmatpush.xpose.msra.mxu0 0.0
    %54 = vmatpush.xpose.msra.mxu0 0.0
    %55 = vmatpush.xpose.msra.mxu0 0.0
    %56 = vmatpush.xpose.msra.mxu0 0.0
    %57 = vmatpush.xpose.msra.mxu0 0.0
    %58 = vmatpush.xpose.msra.mxu0 0.0
    %59 = vmatpush.xpose.msra.mxu0 0.0
    %60 = vmatpush.xpose.msra.mxu0 0.0
    %61 = vmatpush.xpose.msra.mxu0 0.0
    %62 = vmatpush.xpose.msra.mxu0 0.0
    %63 = vmatpush.xpose.msra.mxu0 %v46
    %64 = vmatpush.xpose.msra.mxu0 %v45
    %65 = vmatpush.xpose.msra.mxu0 %v44
    %66 = vmatpush.xpose.msra.mxu0 %v43
    %67 = vmatmul.f32.gmra.mxu0 %v43
    %v68 = vpop.f32.mrf.mxu0
    %v69 = vadd.f32 0.0, %v68
    %70 = vmatmul.f32.gmra.mxu0 %v44
    %v71 = vpop.f32.mrf.mxu0
    %v72 = vadd.f32 0.0, %v71
    %73 = vmatmul.f32.gmra.mxu0 %v45
    %v74 = vpop.f32.mrf.mxu0
    %v75 = vadd.f32 0.0, %v74
    %76 = vmatmul.f32.gmra.mxu0 %v46
    %v77 = vpop.f32.mrf.mxu0
    %v78 = vadd.f32 0.0, %v77
    %79 = vdwg.mxu0
    %v80 = vadd.f32 %v47, %v69
    %v81 = vadd.f32 %v48, %v72
    %v82 = vadd.f32 %v49, %v75
    %v83 = vadd.f32 %v50, %v78
    %vm84 = vcmask 228352
    %85 = vst.msk [vmem:[#allocation5] sm:$0xff] %vm84, %v80
    %86 = vst.msk [vmem:[#allocation5 + $0x8] sm:$0xff] %vm84, %v81
    %87 = vst.msk [vmem:[#allocation5 + $0x10] sm:$0xff] %vm84, %v82
    %vm88 = vcmask 224256
    %89 = vst.msk [vmem:[#allocation5 + $0x18] sm:$0xf] %vm88, %v83
    %v90 = vld [vmem:[%s2] sm:$0xff]
    %v91 = vld [vmem:[%s2 + $0x8] sm:$0xff]
    %v92 = vld [vmem:[%s2 + $0x10] sm:$0xff]
    %v93 = vld [vmem:[%s2 + $0x18] sm:$0xf]
    %94 = vadd.xlane.f32.xlu0 %v43
    %v95 = vpop.xlane.xlu0 %94
    %96 = vadd.xlane.f32.xlu0 %v44
    %v97 = vpop.xlane.xlu0 %96
    %98 = vadd.xlane.f32.xlu0 %v45
    %v99 = vpop.xlane.xlu0 %98
    %vm100 = vcmask 1043456
    %v101 = vsel %vm100, %v46, 0.0
    %102 = vadd.xlane.f32.xlu0 %v101
    %v103 = vpop.xlane.xlu0 %102
    %v104 = vadd.f32 %v90, %v95
    %v105 = vadd.f32 %v91, %v97
    %v106 = vadd.f32 %v92, %v99
    %v107 = vadd.f32 %v93, %v103
    %vm108 = vcmask 7168
    %109 = vst.msk [vmem:[%s2] sm:$0xff] %vm108, %v104
    %110 = vst.msk [vmem:[%s2 + $0x8] sm:$0xff] %vm108, %v105
    %111 = vst.msk [vmem:[%s2 + $0x10] sm:$0xff] %vm108, %v106
    %vm112 = vcmask 3072
    %113 = vst.msk [vmem:[%s2 + $0x18] sm:$0xf] %vm112, %v107
    // Predicated region
    $region14: #{tpu_custom_call.1} parent=1 // pred_check
      _
    $region15: #{tpu_custom_call.1} parent=1 // pred_check_branch
      %115 = sbr.rel (0) target = $region17
    $region16: #{tpu_custom_call.1} parent=1 // pred_region
      %117 = vsyncadd [#allocation4], 0
      %s118 = sshll.u32 [#allocation5], 4
      %s119 = int_to_ptr.vmem [resolvable:$true] %s118
      %s120 = sshll.u32 %s1, 4
      %s121 = int_to_ptr.hbm [resolvable:$true] %s120
      %126 = dma.vmem_to_hbm [thread:$0]  %s119, 512, %s121, [#allocation4], 128, 128, 8
    $region17: #{tpu_custom_call.1} parent=1 // pred_fallthru
      _
    // Predicated region
    $region18: #{tpu_custom_call.1} parent=1 // pred_check
      _
    $region19: #{tpu_custom_call.1} parent=1 // pred_check_branch
      %128 = sbr.rel (0) target = $region21
    $region20: #{tpu_custom_call.1} parent=1 // pred_region
      _
    $region21: #{tpu_custom_call.1} parent=1 // pred_fallthru
      _
    // Predicated region
    $region22: #{tpu_custom_call.1} parent=1 // pred_check
      _
    $region23: #{tpu_custom_call.1} parent=1 // pred_check_branch
      %130 = sbr.rel (0) target = $region25
    $region24: #{tpu_custom_call.1} parent=1 // pred_region
      %132 = dma.done [#allocation4], 512
    $region25: #{tpu_custom_call.1} parent=1 // pred_fallthru
      _
    // Predicated region
    $region26: #{tpu_custom_call.1} parent=1 // pred_check
      _
    $region27: #{tpu_custom_call.1} parent=1 // pred_check_branch
      %134 = sbr.rel (0) target = $region29
    $region28: #{tpu_custom_call.1} parent=1 // pred_region
      _
    $region29: #{tpu_custom_call.1} parent=1 // pred_fallthru
      _
    %135 = vsyncpa [#allocation3], 1
    %136 = vsyncpa [#allocation4], 1

</llo_original>
